<compile_context>
chip_gen: v7x
topology: tpu7x:2x2x1
jax: 0.10.0
libtpu: 0.0.40
codegen_flags: <defaults>
</compile_context>

<pallas_src>
import jax
import jax.numpy as jnp
import numpy as np
from jax.experimental import pallas as pl
from jax.experimental.pallas import tpu as pltpu


# ---------------------------------------------------------------------------
# Fused kernel factory
# ---------------------------------------------------------------------------
def _make_sa_kernel(C, Ck, C2, H, W, HWp, tq, down_sample):
    HW = H * W
    Cgh = Ck + C2          # rows of the pooled [g; h] block
    Ctot = Cgh + Ck        # rows of the fused conv output, ordered [g; h; f]

    def kernel(x_ref, wfgh_ref, bfgh_ref, wv_ref, bv_ref, *rest):
        if down_sample:
            sel_ref, o_ref, f_scr, gpT_scr, hp_scr = rest
        else:
            o_ref, f_scr, gpT_scr, hp_scr = rest

        q = pl.program_id(1)

        # ---- once per batch: fused f/g/h conv + 2x2 max-pool, stashed in VMEM scratch ----
        @pl.when(q == 0)
        def _():
            xb = x_ref[0].astype(jnp.bfloat16)                           # (C, HW)
            fgh = jnp.dot(wfgh_ref[...], xb,
                          preferred_element_type=jnp.float32) + bfgh_ref[...]
            gh = fgh[:Cgh, :]                                            # (Cgh, HW) f32
            f_scr[...] = fgh[Cgh:, :].astype(jnp.bfloat16)               # (Ck, HW)

            if down_sample:
                # neighbour maxima via lane rolls (free-ish VPU/XLU work)...
                m = jnp.maximum(gh, pltpu.roll(gh, HW - 1, axis=1))      # p vs p+1
                m = jnp.maximum(m, pltpu.roll(m, HW - W, axis=1))        # p vs p+W
                # ...then one 0/1 matmul compacts the stride-2 window origins.
                ghp = jnp.dot(m.astype(jnp.bfloat16), sel_ref[...],
                              preferred_element_type=jnp.float32)        # (Cgh, HWp)
            else:
                ghp = gh

            # g_p stored transposed so the score matmul below is plain NN.
            gpT_scr[...] = jnp.transpose(ghp[:Ck, :]).astype(jnp.bfloat16)   # (HWp, Ck)
            hp_scr[...] = ghp[Ck:, :].astype(jnp.bfloat16)                   # (C2, HWp)

        # ---- per query tile: scores, softmax over keys (sublane axis), output ----
        qs = pl.multiple_of(q * tq, tq)
        f_q = f_scr[:, pl.ds(qs, tq)]                                    # (Ck, tq) bf16
        sT = jnp.dot(gpT_scr[...], f_q,
                     preferred_element_type=jnp.float32)                 # (HWp, tq)
        sT = sT - jnp.max(sT, axis=0, keepdims=True)
        e = jnp.exp(sT)
        betaT = e * pl.reciprocal(jnp.sum(e, axis=0, keepdims=True), approx=True)

        attn = jnp.dot(hp_scr[...], betaT.astype(jnp.bfloat16),
                       preferred_element_type=jnp.float32)               # (C2, tq)
        vout = jnp.dot(wv_ref[...], attn.astype(jnp.bfloat16),
                       preferred_element_type=jnp.float32) + bv_ref[...]  # (C, tq)
        # residual; gamma already folded into wv/bv.  Lane-dense (tq-wide) store.
        o_ref[0] = vout + x_ref[0, :, pl.ds(qs, tq)]

    return kernel


# ---------------------------------------------------------------------------
# 0/1 compaction matrix: picks the top-left corner position of every 2x2 window
# ---------------------------------------------------------------------------
def _pool_selection_matrix(H, W):
    Hp, Wp = H // 2, W // 2
    HW, HWp = H * W, Hp * Wp
    qi, qj = np.meshgrid(np.arange(Hp), np.arange(Wp), indexing="ij")
    rows = (2 * qi * W + 2 * qj).reshape(-1)
    cols = (qi * Wp + qj).reshape(-1)
    S = np.zeros((HW, HWp), np.float32)
    S[rows, cols] = 1.0
    return jnp.asarray(S, dtype=jnp.bfloat16)


# ---------------------------------------------------------------------------
# Parameter setup (glue)
# ---------------------------------------------------------------------------
def spectral_normalize(w, eps=1e-12):
    # TODO(synk): PyTorch spectral_norm uses persistent power-iteration u/v buffers;
    # here (synthetic init, outside the kernel) we divide by the exact top singular value.
    sigma = jnp.linalg.svd(w, compute_uv=False)[0]
    return w / jnp.maximum(sigma, eps)


def init_params(key, C, K):
    Ck, C2 = C // K, C // 2
    ks = jax.random.split(key, 8)

    def mk_w(k, cin, cout):
        w = jax.random.normal(k, (cin, cout), jnp.float32) * 0.1
        return spectral_normalize(w)

    return {
        "wf": mk_w(ks[0], C, Ck),
        "bf": jax.random.normal(ks[1], (1, Ck), jnp.float32) * 0.05,
        "wg": mk_w(ks[2], C, Ck),
        "bg": jax.random.normal(ks[3], (1, Ck), jnp.float32) * 0.05,
        "wh": mk_w(ks[4], C, C2),
        "bh": jax.random.normal(ks[5], (1, C2), jnp.float32) * 0.05,
        "wv": mk_w(ks[6], C2, C),
        "bv": jax.random.normal(ks[7], (1, C), jnp.float32) * 0.05,
        # PyTorch inits gamma to 0 (output == x); nonzero so attention is exercised.
        "gamma": jnp.full((1, 1), 0.5, jnp.float32),
    }


# ---------------------------------------------------------------------------
# Full forward (wrapper)
# ---------------------------------------------------------------------------
def sa_conv2d_forward(x_nchw, params, K=8, down_sample=True, tq=None):
    B, C, H, W = x_nchw.shape
    Ck, C2 = C // K, C // 2
    Cgh, Ctot = Ck + C2, 2 * Ck + C2
    HW = H * W
    if down_sample:
        assert H % 2 == 0 and W % 2 == 0, "2x2 max-pool needs even H, W"
        HWp = (H // 2) * (W // 2)
    else:
        HWp = HW

    if tq is None:                       # largest 128-multiple query tile dividing HW
        tq = HW
        for cand in (512, 256, 128):
            if HW % cand == 0:
                tq = cand
                break
    assert HW % tq == 0
    nq = HW // tq

    # NCHW -> (B, C, HW): pure reshape, no transpose on input or output.
    x_flat = x_nchw.reshape(B, C, HW)
    gamma = params["gamma"].reshape(())

    # Fused f/g/h conv weight (rows ordered [g; h; f]); biases as column vectors.
    w_fgh = jnp.concatenate(
        [params["wg"].T, params["wh"].T, params["wf"].T], axis=0).astype(jnp.bfloat16)
    b_fgh = jnp.concatenate(
        [params["bg"].reshape(-1), params["bh"].reshape(-1),
         params["bf"].reshape(-1)]).reshape(Ctot, 1).astype(jnp.float32)
    wv = (gamma * params["wv"]).T.astype(jnp.bfloat16)      # (C, C2), gamma folded in
    bv = (gamma * params["bv"]).reshape(C, 1).astype(jnp.float32)

    inv = dict(pipeline_mode=pl.Buffered(1))                 # grid-invariant -> 1 buffer
    in_specs = [
        pl.BlockSpec((1, C, HW), lambda b, q: (b, 0, 0)),    # x (whole image per batch)
        pl.BlockSpec((Ctot, C), lambda b, q: (0, 0), **inv),  # fused conv weight
        pl.BlockSpec((Ctot, 1), lambda b, q: (0, 0), **inv),  # fused conv bias
        pl.BlockSpec((C, C2), lambda b, q: (0, 0), **inv),    # gamma * wv^T
        pl.BlockSpec((C, 1), lambda b, q: (0, 0), **inv),     # gamma * bv
    ]
    inputs = [x_flat, w_fgh, b_fgh, wv, bv]
    if down_sample:
        sel = _pool_selection_matrix(H, W)                   # (HW, HWp) 0/1 bf16
        in_specs.append(pl.BlockSpec((HW, HWp), lambda b, q: (0, 0), **inv))
        inputs.append(sel)

    scratch_shapes = [
        pltpu.VMEM((Ck, HW), jnp.bfloat16),    # f   (channels-first, full image)
        pltpu.VMEM((HWp, Ck), jnp.bfloat16),   # g_p^T
        pltpu.VMEM((C2, HWp), jnp.bfloat16),   # h_p
    ]

    # ---- VMEM budget / cost hints -------------------------------------------------
    est = (
        2 * C * HW * 4                                    # x block (double-buffered)
        + 2 * C * tq * 4                                  # out block (double-buffered)
        + (Ctot * C + C * C2) * 2 + (Ctot + C) * 4        # weights/biases (1 buffer)
        + (HW * HWp * 2 if down_sample else 0)            # selection matrix (1 buffer)
        + (Ck * HW + HWp * Ck + C2 * HWp) * 2             # scratch
        + (Ctot + 2 * Cgh) * HW * 4                       # q==0 conv / roll-max temps
        + 3 * HWp * tq * 4                                # sT / exp / beta
        + (C2 + C) * tq * 4                               # attn, vout
    )
    vmem_limit = int(min(max(int(est * 1.5), 32 * 1024 * 1024), 96 * 1024 * 1024))

    macs = (Ctot * C * HW + HWp * Ck * HW + C2 * HWp * HW + C * C2 * HW
            + (Cgh * HW * HWp if down_sample else 0))
    cost = pl.CostEstimate(
        flops=2 * B * macs,
        transcendentals=B * HW * HWp,
        bytes_accessed=(2 * B * C * HW * 4 + (Ctot * C + C * C2) * 2
                        + (Ctot + C) * 4 + (HW * HWp * 2 if down_sample else 0)),
    )

    kernel = _make_sa_kernel(C, Ck, C2, H, W, HWp, tq, down_sample)
    out_flat = pl.pallas_call(
        kernel,
        out_shape=jax.ShapeDtypeStruct((B, C, HW), jnp.float32),
        grid_spec=pltpu.PrefetchScalarGridSpec(
            num_scalar_prefetch=0,
            grid=(B, nq),
            in_specs=in_specs,
            out_specs=pl.BlockSpec((1, C, tq), lambda b, q: (b, 0, q)),
            scratch_shapes=scratch_shapes,
        ),
        compiler_params=pltpu.CompilerParams(
            dimension_semantics=("parallel", "arbitrary"),
            vmem_limit_bytes=vmem_limit,
        ),
        cost_estimate=cost,
    )(*inputs)

    return out_flat.reshape(B, C, H, W)


# ---------------------------------------------------------------------------
# Pure-JAX reference (mirrors the PyTorch forward) for a correctness check
# ---------------------------------------------------------------------------
def reference_forward(x_nchw, params, K=8, down_sample=True):
    B, C, H, W = x_nchw.shape
    Ck, C2 = C // K, C // 2

    def conv(x, w, b):  # w: (Cin, Cout), x: NCHW
        return jnp.einsum("bchw,co->bohw", x, w) + b.reshape(1, -1, 1, 1)

    f = conv(x_nchw, params["wf"], params["bf"]).reshape(B, Ck, H * W)
    g = conv(x_nchw, params["wg"], params["bg"])
    h = conv(x_nchw, params["wh"], params["bh"])
    if down_sample:
        g = g.reshape(B, Ck, H // 2, 2, W // 2, 2).max(axis=(3, 5)).reshape(B, Ck, -1)
        h = h.reshape(B, C2, H // 2, 2, W // 2, 2).max(axis=(3, 5)).reshape(B, C2, -1)
    else:
        g = g.reshape(B, Ck, -1)
        h = h.reshape(B, C2, -1)
    s = jnp.einsum("ijk,ijl->ikl", f, g)
    beta = jax.nn.softmax(s, axis=-1)
    attn = jnp.einsum("ijk,ilk->ijl", h, beta).reshape(B, C2, H, W)
    v = conv(attn, params["wv"], params["bv"])
    return params["gamma"].reshape(()) * v + x_nchw


if __name__ == "__main__":
    key = jax.random.PRNGKey(0)
    B, C, H, W = 2, 32, 16, 16   # C must be divisible by K=8 and by 2
    K = 8

    k_x, k_p = jax.random.split(key)
    x = jax.random.normal(k_x, (B, C, H, W), jnp.float32)
    params = init_params(k_p, C, K)

    # tq=128 -> 2 query tiles per batch, exercising the per-batch scratch carry.
    out = sa_conv2d_forward(x, params, K=K, down_sample=True, tq=128)
    out = jax.block_until_ready(out)

    ref = jax.block_until_ready(reference_forward(x, params, K=K, down_sample=True))
    np.testing.assert_allclose(np.asarray(out), np.asarray(ref), rtol=2e-2, atol=2e-2)
    assert out.shape == (B, C, H, W)

    print("KERNEL_OK")
</pallas_src>

<mosaic_0001>
module attributes {stable_mosaic.version = 11 : i64} {
  func.func @kernel(%arg0: i32, %arg1: i32, %arg2: memref<1x32x256xf32, #tpu.memory_space<vmem>>, %arg3: memref<24x32xbf16, #tpu.memory_space<vmem>>, %arg4: memref<24x1xf32, #tpu.memory_space<vmem>>, %arg5: memref<32x16xbf16, #tpu.memory_space<vmem>>, %arg6: memref<32x1xf32, #tpu.memory_space<vmem>>, %arg7: memref<256x64xbf16, #tpu.memory_space<vmem>>, %arg8: memref<1x32x128xf32, #tpu.memory_space<vmem>>, %arg9: memref<4x256xbf16, #tpu.memory_space<vmem>>, %arg10: memref<64x4xbf16, #tpu.memory_space<vmem>>, %arg11: memref<16x64xbf16, #tpu.memory_space<vmem>>) attributes {dimension_semantics = [#tpu.dimension_semantics<parallel>, #tpu.dimension_semantics<arbitrary>], iteration_bounds = array<i64: 2, 2>, scalar_prefetch = 0 : i64, scratch_operands = 3 : i64, tpu.core_type = #tpu.core_type<tc>, window_params = [{transform_indices = @transform_0, window_bounds = array<i64: 1, 32, 256>}, {pipeline_mode = #tpu.pipeline_mode<synchronous>, transform_indices = @transform_1, window_bounds = array<i64: 24, 32>}, {pipeline_mode = #tpu.pipeline_mode<synchronous>, transform_indices = @transform_2, window_bounds = array<i64: 24, 1>}, {pipeline_mode = #tpu.pipeline_mode<synchronous>, transform_indices = @transform_3, window_bounds = array<i64: 32, 16>}, {pipeline_mode = #tpu.pipeline_mode<synchronous>, transform_indices = @transform_4, window_bounds = array<i64: 32, 1>}, {pipeline_mode = #tpu.pipeline_mode<synchronous>, transform_indices = @transform_5, window_bounds = array<i64: 256, 64>}, {transform_indices = @transform_6, window_bounds = array<i64: 1, 32, 128>}]} {
    %c0_i32 = arith.constant 0 : i32
    %0 = arith.cmpi eq, %arg1, %c0_i32 : i32
    %1 = arith.extui %0 : i1 to i32
    %c0_i32_0 = arith.constant 0 : i32
    %2 = arith.cmpi ne, %1, %c0_i32_0 : i32
    scf.if %2 {
      %c0_18 = arith.constant 0 : index
      %c0_19 = arith.constant 0 : index
      %c0_20 = arith.constant 0 : index
      %35 = vector.load %arg2[%c0_18, %c0_19, %c0_20] : memref<1x32x256xf32, #tpu.memory_space<vmem>>, vector<1x32x256xf32>
      %36 = vector.shape_cast %35 : vector<1x32x256xf32> to vector<32x256xf32>
      %37 = arith.truncf %36 : vector<32x256xf32> to vector<32x256xbf16>
      %c0_21 = arith.constant 0 : index
      %c0_22 = arith.constant 0 : index
      %38 = vector.load %arg3[%c0_21, %c0_22] : memref<24x32xbf16, #tpu.memory_space<vmem>>, vector<24x32xbf16>
      %cst_23 = arith.constant dense<0.000000e+00> : vector<24x256xf32>
      %39 = tpu.matmul %38, %37, %cst_23 {dimension_numbers = #tpu.dot_dimension_numbers<[1], [0], [0], [1], [0, 0, 1, 1], [], []>} : vector<24x32xbf16>, vector<32x256xbf16>, vector<24x256xf32> -> vector<24x256xf32>
      %c0_24 = arith.constant 0 : index
      %c0_25 = arith.constant 0 : index
      %40 = vector.load %arg4[%c0_24, %c0_25] : memref<24x1xf32, #tpu.memory_space<vmem>>, vector<24x1xf32>
      %41 = vector.broadcast %40 : vector<24x1xf32> to vector<24x256xf32>
      %42 = arith.addf %39, %41 : vector<24x256xf32>
      %43 = vector.extract_strided_slice %42 {offsets = [0, 0], sizes = [20, 256], strides = [1, 1]} : vector<24x256xf32> to vector<20x256xf32>
      %44 = vector.extract_strided_slice %42 {offsets = [20, 0], sizes = [4, 256], strides = [1, 1]} : vector<24x256xf32> to vector<4x256xf32>
      %45 = arith.truncf %44 : vector<4x256xf32> to vector<4x256xbf16>
      %c0_26 = arith.constant 0 : index
      %c0_27 = arith.constant 0 : index
      %46 = vector.load %arg9[%c0_26, %c0_27] : memref<4x256xbf16, #tpu.memory_space<vmem>>, vector<4x256xbf16>
      tpu.vector_store %arg9[%c0_26, %c0_27], %45 {strides = array<i32>} : memref<4x256xbf16, #tpu.memory_space<vmem>>, vector<4x256xbf16>,
      %c255_i32 = arith.constant 255 : i32
      %47 = tpu.dynamic_rotate %43 by %c255_i32 dim 1 : vector<20x256xf32>, i32 -> vector<20x256xf32>
      %48 = arith.maximumf %43, %47 : vector<20x256xf32>
      %c240_i32 = arith.constant 240 : i32
      %49 = tpu.dynamic_rotate %48 by %c240_i32 dim 1 : vector<20x256xf32>, i32 -> vector<20x256xf32>
      %50 = arith.maximumf %48, %49 : vector<20x256xf32>
      %51 = arith.truncf %50 : vector<20x256xf32> to vector<20x256xbf16>
      %c0_28 = arith.constant 0 : index
      %c0_29 = arith.constant 0 : index
      %52 = vector.load %arg7[%c0_28, %c0_29] : memref<256x64xbf16, #tpu.memory_space<vmem>>, vector<256x64xbf16>
      %cst_30 = arith.constant dense<0.000000e+00> : vector<20x64xf32>
      %53 = tpu.matmul %51, %52, %cst_30 {dimension_numbers = #tpu.dot_dimension_numbers<[1], [0], [0], [1], [0, 0, 1, 1], [], []>} : vector<20x256xbf16>, vector<256x64xbf16>, vector<20x64xf32> -> vector<20x64xf32>
      %54 = vector.extract_strided_slice %53 {offsets = [0, 0], sizes = [4, 64], strides = [1, 1]} : vector<20x64xf32> to vector<4x64xf32>
      %55 = tpu.transpose %54, [1, 0] : vector<4x64xf32> -> vector<64x4xf32>
      %56 = arith.truncf %55 : vector<64x4xf32> to vector<64x4xbf16>
      %c0_31 = arith.constant 0 : index
      %c0_32 = arith.constant 0 : index
      %57 = vector.load %arg10[%c0_31, %c0_32] : memref<64x4xbf16, #tpu.memory_space<vmem>>, vector<64x4xbf16>
      tpu.vector_store %arg10[%c0_31, %c0_32], %56 {strides = array<i32>} : memref<64x4xbf16, #tpu.memory_space<vmem>>, vector<64x4xbf16>,
      %58 = vector.extract_strided_slice %53 {offsets = [4, 0], sizes = [16, 64], strides = [1, 1]} : vector<20x64xf32> to vector<16x64xf32>
      %59 = arith.truncf %58 : vector<16x64xf32> to vector<16x64xbf16>
      %c0_33 = arith.constant 0 : index
      %c0_34 = arith.constant 0 : index
      %60 = vector.load %arg11[%c0_33, %c0_34] : memref<16x64xbf16, #tpu.memory_space<vmem>>, vector<16x64xbf16>
      tpu.vector_store %arg11[%c0_33, %c0_34], %59 {strides = array<i32>} : memref<16x64xbf16, #tpu.memory_space<vmem>>, vector<16x64xbf16>,
    } else {
    }
    %c128_i32 = arith.constant 128 : i32
    %3 = arith.muli %arg1, %c128_i32 : i32
    %4 = tpu.assume_multiple %3, 128 : i32
    %c0 = arith.constant 0 : index
    %5 = arith.index_cast %4 : i32 to index
    %6 = vector.load %arg9[%c0, %5] : memref<4x256xbf16, #tpu.memory_space<vmem>>, vector<4x128xbf16>
    %c0_1 = arith.constant 0 : index
    %c0_2 = arith.constant 0 : index
    %7 = vector.load %arg10[%c0_1, %c0_2] : memref<64x4xbf16, #tpu.memory_space<vmem>>, vector<64x4xbf16>
    %cst = arith.constant dense<0.000000e+00> : vector<64x128xf32>
    %8 = tpu.matmul %7, %6, %cst {dimension_numbers = #tpu.dot_dimension_numbers<[1], [0], [0], [1], [0, 0, 1, 1], [], []>} : vector<64x4xbf16>, vector<4x128xbf16>, vector<64x128xf32> -> vector<64x128xf32>
    %cst_3 = arith.constant dense<0xFF800000> : vector<128xf32>
    %9 = vector.multi_reduction <maximumf>, %8, %cst_3 [0] : vector<64x128xf32> to vector<128xf32>
    %10 = vector.shape_cast %9 : vector<128xf32> to vector<1x128xf32>
    %11 = vector.broadcast %10 : vector<1x128xf32> to vector<64x128xf32>
    %12 = arith.subf %8, %11 : vector<64x128xf32>
    %13 = math.exp %12 : vector<64x128xf32>
    %cst_4 = arith.constant dense<0.000000e+00> : vector<128xf32>
    %14 = vector.multi_reduction <add>, %13, %cst_4 [0] : vector<64x128xf32> to vector<128xf32>
    %15 = vector.shape_cast %14 : vector<128xf32> to vector<1x128xf32>
    %16 = tpu.reciprocal %15 {approx = true} : vector<1x128xf32> -> vector<1x128xf32>
    %17 = vector.broadcast %16 : vector<1x128xf32> to vector<64x128xf32>
    %18 = arith.mulf %13, %17 : vector<64x128xf32>
    %c0_5 = arith.constant 0 : index
    %c0_6 = arith.constant 0 : index
    %19 = vector.load %arg11[%c0_5, %c0_6] : memref<16x64xbf16, #tpu.memory_space<vmem>>, vector<16x64xbf16>
    %20 = arith.truncf %18 : vector<64x128xf32> to vector<64x128xbf16>
    %cst_7 = arith.constant dense<0.000000e+00> : vector<16x128xf32>
    %21 = tpu.matmul %19, %20, %cst_7 {dimension_numbers = #tpu.dot_dimension_numbers<[1], [0], [0], [1], [0, 0, 1, 1], [], []>} : vector<16x64xbf16>, vector<64x128xbf16>, vector<16x128xf32> -> vector<16x128xf32>
    %c0_8 = arith.constant 0 : index
    %c0_9 = arith.constant 0 : index
    %22 = vector.load %arg5[%c0_8, %c0_9] : memref<32x16xbf16, #tpu.memory_space<vmem>>, vector<32x16xbf16>
    %23 = arith.truncf %21 : vector<16x128xf32> to vector<16x128xbf16>
    %cst_10 = arith.constant dense<0.000000e+00> : vector<32x128xf32>
    %24 = tpu.matmul %22, %23, %cst_10 {dimension_numbers = #tpu.dot_dimension_numbers<[1], [0], [0], [1], [0, 0, 1, 1], [], []>} : vector<32x16xbf16>, vector<16x128xbf16>, vector<32x128xf32> -> vector<32x128xf32>
    %c0_11 = arith.constant 0 : index
    %c0_12 = arith.constant 0 : index
    %25 = vector.load %arg6[%c0_11, %c0_12] : memref<32x1xf32, #tpu.memory_space<vmem>>, vector<32x1xf32>
    %26 = vector.broadcast %25 : vector<32x1xf32> to vector<32x128xf32>
    %27 = arith.addf %24, %26 : vector<32x128xf32>
    %c0_13 = arith.constant 0 : index
    %c0_14 = arith.constant 0 : index
    %28 = arith.index_cast %4 : i32 to index
    %29 = vector.load %arg2[%c0_13, %c0_14, %28] : memref<1x32x256xf32, #tpu.memory_space<vmem>>, vector<1x32x128xf32>
    %30 = vector.shape_cast %29 : vector<1x32x128xf32> to vector<32x128xf32>
    %31 = arith.addf %27, %30 : vector<32x128xf32>
    %c0_15 = arith.constant 0 : index
    %c0_16 = arith.constant 0 : index
    %c0_17 = arith.constant 0 : index
    %32 = vector.load %arg8[%c0_15, %c0_16, %c0_17] : memref<1x32x128xf32, #tpu.memory_space<vmem>>, vector<1x32x128xf32>
    %33 = vector.shape_cast %32 : vector<1x32x128xf32> to vector<32x128xf32>
    %34 = vector.shape_cast %31 : vector<32x128xf32> to vector<1x32x128xf32>
    tpu.vector_store %arg8[%c0_15, %c0_16, %c0_17], %34 {strides = array<i32>} : memref<1x32x128xf32, #tpu.memory_space<vmem>>, vector<1x32x128xf32>,
    return
  }
  func.func @transform_0(%arg0: i32, %arg1: i32) -> (i32, i32, i32) {
    %c0_i32 = arith.constant 0 : i32
    %c0_i32_0 = arith.constant 0 : i32
    %c0_i32_1 = arith.constant 0 : i32
    return %arg0, %c0_i32, %c0_i32_0 : i32, i32, i32
  }
  func.func @transform_1(%arg0: i32, %arg1: i32) -> (i32, i32) {
    %c0_i32 = arith.constant 0 : i32
    %c0_i32_0 = arith.constant 0 : i32
    %c0_i32_1 = arith.constant 0 : i32
    return %c0_i32, %c0_i32_0 : i32, i32
  }
  func.func @transform_2(%arg0: i32, %arg1: i32) -> (i32, i32) {
    %c0_i32 = arith.constant 0 : i32
    %c0_i32_0 = arith.constant 0 : i32
    %c0_i32_1 = arith.constant 0 : i32
    return %c0_i32, %c0_i32_0 : i32, i32
  }
  func.func @transform_3(%arg0: i32, %arg1: i32) -> (i32, i32) {
    %c0_i32 = arith.constant 0 : i32
    %c0_i32_0 = arith.constant 0 : i32
    %c0_i32_1 = arith.constant 0 : i32
    return %c0_i32, %c0_i32_0 : i32, i32
  }
  func.func @transform_4(%arg0: i32, %arg1: i32) -> (i32, i32) {
    %c0_i32 = arith.constant 0 : i32
    %c0_i32_0 = arith.constant 0 : i32
    %c0_i32_1 = arith.constant 0 : i32
    return %c0_i32, %c0_i32_0 : i32, i32
  }
  func.func @transform_5(%arg0: i32, %arg1: i32) -> (i32, i32) {
    %c0_i32 = arith.constant 0 : i32
    %c0_i32_0 = arith.constant 0 : i32
    %c0_i32_1 = arith.constant 0 : i32
    return %c0_i32, %c0_i32_0 : i32, i32
  }
  func.func @transform_6(%arg0: i32, %arg1: i32) -> (i32, i32, i32) {
    %c0_i32 = arith.constant 0 : i32
    %c0_i32_0 = arith.constant 0 : i32
    return %arg0, %c0_i32, %arg1 : i32, i32, i32
  }
}

</mosaic_0001>

<llo_original>
// kernel: tpu_custom_call.1
$region0: #{tpu_custom_call.1}
  #allocation0 [shape = 'u32[]', space=smem, size = 0x4, offset = 0x4, fixed_abs, tag = 'smem constant byte address 0x4 - core index']
  #allocation1 [shape = 'u32[144,128]{1,0:T(1,128)}', space=vmem, size = 0x12000, scoped, tag = 'internal scratch']
  #allocation2 [shape = 'bf16[4,256]{1,0:T(4,128)(2,1)}', space=vmem, size = 0x800, scoped, tag = 'scratch operand']
  #allocation3 [shape = 'bf16[64,4]{1,0:T(16,128)(2,1)}', space=vmem, size = 0x4000, scoped, tag = 'scratch operand']
  #allocation4 [shape = 'bf16[16,64]{1,0:T(16,128)(2,1)}', space=vmem, size = 0x1000, scoped, tag = 'scratch operand']
  %s0 = inlined_call_operand.vmem [shape: f32[2,32,256], index: 0, kind: input, shape index: {}]
  %s1 = inlined_call_operand.vmem [shape: bf16[24,32], index: 1, kind: input, shape index: {}]
  %s2 = inlined_call_operand.vmem [shape: f32[24,1], index: 2, kind: input, shape index: {}]
  %s3 = inlined_call_operand.vmem [shape: bf16[32,16], index: 3, kind: input, shape index: {}]
  %s4 = inlined_call_operand.vmem [shape: f32[32,1], index: 4, kind: input, shape index: {}]
  %s5 = inlined_call_operand.vmem [shape: bf16[256,64], index: 5, kind: input, shape index: {}]
  %s6 = inlined_call_operand.hbm [shape: f32[2,32,256], index: 6, kind: output, shape index: {}]
  %s7 = sld [smem:[#allocation0]]
  $region61: #{tpu_custom_call.1} parent=0
    _
  %s9 = ssub.s32 1, %s7
  %s10 = scalar_select 0, %s9, %s7
  $region1: #{tpu_custom_call.1} parent=0
    #allocation5 [shape = 'u8[32768]{0}', space=vmem, size = 0x8000, scoped, tag = 'output window, operand 0']
    #allocation6 [shape = 's32[2]{0}', space=sflag, size = 0x8, scoped, tag = 'scoped memory for tpu_custom_call.1']
    %11 = vsyncpa [#allocation6], 0
    %s12 = scalar_lea.sflag [#allocation6], 1
    %13 = vsyncpa %s12, 0
    loop: start=0, step=1, limit=6
    $region2: #{tpu_custom_call.1} parent=1 // loop_pre_header
      _
    $region3: #{tpu_custom_call.1} parent=1 // loop_header
      %s15 = sphi 0, %s19
      %p16 = scmp.ge.s32.totalorder %s15, 6
      %s22 = sphi 0, %s34
      %s23 = sphi 0, %s30
      %s24 = sphi 0, %s22
      %s25 = sphi 0, %s23
      %s26 = sphi 0, %s24
      %s27 = sphi 0, %s25
      %s37 = sphi 0, %s39
      %s40 = sphi 0, %s37
      %s41 = sphi 0, %s40
      %s57 = sphi 0, %s41
      %s61 = sphi 0, %s61
      %s63 = sphi 0, %s61
      %s64 = sphi 0, %s63
      %s78 = sphi 0, %s64
      %s82 = sphi 0, %s82
      %s84 = sphi 0, %s82
      %s85 = sphi 0, %s84
      %s99 = sphi 0, %s85
      %s103 = sphi 0, %s103
      %s105 = sphi 0, %s103
      %s106 = sphi 0, %s105
      %s120 = sphi 0, %s106
      %s124 = sphi 0, %s124
      %s126 = sphi 0, %s124
      %s127 = sphi 0, %s126
      %s141 = sphi 0, %s127
      %s145 = sphi 0, %s145
      %s147 = sphi 0, %s145
      %s148 = sphi 0, %s147
      %s162 = sphi 0, %s148
      %s170 = sphi 0, %s172
      %s173 = sphi 0, %s170
      %s174 = sphi 0, %s173
      %s190 = sphi 0, %s174
    $region4: #{tpu_custom_call.1} parent=1 // loop_header_branch
      %18 = sbr.rel (%p16) target = $region8
    $region5: #{tpu_custom_call.1} parent=1 // loop_body
      %s20 = ssub.s32 %s15, 1
      %s21 = ssub.s32 %s15, 2
      %s28 = sadd.s32 1, %s23
      %p29 = scmp.ge.s32.totalorder %s28, 2
      %s30 = scalar_select %p29, 0, %s28
      %s31 = sadd.s32 1, %s22
      %s32 = scalar_select %p29, %s31, %s22
      %p33 = scmp.ge.s32.totalorder %s32, 2
      %s34 = scalar_select %p33, 0, %s32
      %s35 = ssub.s32 %s22, %s34
      %p36 = scmp.eq.s32.totalorder %s35, 0
      %s38 = sadd.s32 %s37, 1
      %s39 = scalar_select %p36, %s37, %s38
      %p42 = pneg %p36
      %p43 = scmp.eq.s32.totalorder %s15, 3
      %p44 = por %p42, %p43
      %p45 = scmp.ne.s32.totalorder %s37, %s40
      %p46 = scmp.eq.s32.totalorder %s15, 0
      %p47 = por %p45, %p46
      %p48 = scmp.ne.s32.totalorder %s37, %s40
      %p49 = scmp.eq.s32.totalorder %s20, 3
      %p50 = por %p48, %p49
      %p51 = scmp.ne.s32.totalorder %s40, %s41
      %p52 = scmp.eq.s32.totalorder %s20, 0
      %p53 = por %p51, %p52
      %p54 = scmp.ne.s32.totalorder %s40, %s41
      %p55 = scmp.eq.s32.totalorder %s21, 3
      %p56 = por %p54, %p55
      %p58 = scmp.ne.s32.totalorder %s41, %s57
      %p59 = scmp.eq.s32.totalorder %s21, 0
      %p60 = por %p58, %p59
      %s62 = sadd.s32 %s61, 1
      %p65 = scmp.eq.s32.totalorder %s15, 3
      %p66 = scmp.ne.s32.totalorder %s61, %s63
      %p67 = scmp.eq.s32.totalorder %s15, 0
      %p68 = por %p66, %p67
      %p69 = scmp.ne.s32.totalorder %s61, %s63
      %p70 = scmp.eq.s32.totalorder %s20, 3
      %p71 = por %p69, %p70
      %p72 = scmp.ne.s32.totalorder %s63, %s64
      %p73 = scmp.eq.s32.totalorder %s20, 0
      %p74 = por %p72, %p73
      %p75 = scmp.ne.s32.totalorder %s63, %s64
      %p76 = scmp.eq.s32.totalorder %s21, 3
      %p77 = por %p75, %p76
      %p79 = scmp.ne.s32.totalorder %s64, %s78
      %p80 = scmp.eq.s32.totalorder %s21, 0
      %p81 = por %p79, %p80
      %s83 = sadd.s32 %s82, 1
      %p86 = scmp.eq.s32.totalorder %s15, 3
      %p87 = scmp.ne.s32.totalorder %s82, %s84
      %p88 = scmp.eq.s32.totalorder %s15, 0
      %p89 = por %p87, %p88
      %p90 = scmp.ne.s32.totalorder %s82, %s84
      %p91 = scmp.eq.s32.totalorder %s20, 3
      %p92 = por %p90, %p91
      %p93 = scmp.ne.s32.totalorder %s84, %s85
      %p94 = scmp.eq.s32.totalorder %s20, 0
      %p95 = por %p93, %p94
      %p96 = scmp.ne.s32.totalorder %s84, %s85
      %p97 = scmp.eq.s32.totalorder %s21, 3
      %p98 = por %p96, %p97
      %p100 = scmp.ne.s32.totalorder %s85, %s99
      %p101 = scmp.eq.s32.totalorder %s21, 0
      %p102 = por %p100, %p101
      %s104 = sadd.s32 %s103, 1
      %p107 = scmp.eq.s32.totalorder %s15, 3
      %p108 = scmp.ne.s32.totalorder %s103, %s105
      %p109 = scmp.eq.s32.totalorder %s15, 0
      %p110 = por %p108, %p109
      %p111 = scmp.ne.s32.totalorder %s103, %s105
      %p112 = scmp.eq.s32.totalorder %s20, 3
      %p113 = por %p111, %p112
      %p114 = scmp.ne.s32.totalorder %s105, %s106
      %p115 = scmp.eq.s32.totalorder %s20, 0
      %p116 = por %p114, %p115
      %p117 = scmp.ne.s32.totalorder %s105, %s106
      %p118 = scmp.eq.s32.totalorder %s21, 3
      %p119 = por %p117, %p118
      %p121 = scmp.ne.s32.totalorder %s106, %s120
      %p122 = scmp.eq.s32.totalorder %s21, 0
      %p123 = por %p121, %p122
      %s125 = sadd.s32 %s124, 1
      %p128 = scmp.eq.s32.totalorder %s15, 3
      %p129 = scmp.ne.s32.totalorder %s124, %s126
      %p130 = scmp.eq.s32.totalorder %s15, 0
      %p131 = por %p129, %p130
      %p132 = scmp.ne.s32.totalorder %s124, %s126
      %p133 = scmp.eq.s32.totalorder %s20, 3
      %p134 = por %p132, %p133
      %p135 = scmp.ne.s32.totalorder %s126, %s127
      %p136 = scmp.eq.s32.totalorder %s20, 0
      %p137 = por %p135, %p136
      %p138 = scmp.ne.s32.totalorder %s126, %s127
      %p139 = scmp.eq.s32.totalorder %s21, 3
      %p140 = por %p138, %p139
      %p142 = scmp.ne.s32.totalorder %s127, %s141
      %p143 = scmp.eq.s32.totalorder %s21, 0
      %p144 = por %p142, %p143
      %s146 = sadd.s32 %s145, 1
      %p149 = scmp.eq.s32.totalorder %s15, 3
      %p150 = scmp.ne.s32.totalorder %s145, %s147
      %p151 = scmp.eq.s32.totalorder %s15, 0
      %p152 = por %p150, %p151
      %p153 = scmp.ne.s32.totalorder %s145, %s147
      %p154 = scmp.eq.s32.totalorder %s20, 3
      %p155 = por %p153, %p154
      %p156 = scmp.ne.s32.totalorder %s147, %s148
      %p157 = scmp.eq.s32.totalorder %s20, 0
      %p158 = por %p156, %p157
      %p159 = scmp.ne.s32.totalorder %s147, %s148
      %p160 = scmp.eq.s32.totalorder %s21, 3
      %p161 = por %p159, %p160
      %p163 = scmp.ne.s32.totalorder %s148, %s162
      %p164 = scmp.eq.s32.totalorder %s21, 0
      %p165 = por %p163, %p164
      %s166 = ssub.s32 %s22, %s34
      %s167 = ssub.s32 %s23, %s30
      %s168 = sor.u32 %s166, %s167
      %p169 = scmp.eq.s32.totalorder %s168, 0
      %s171 = sadd.s32 %s170, 1
      %s172 = scalar_select %p169, %s170, %s171
      %p175 = pneg %p169
      %p176 = scmp.eq.s32.totalorder %s15, 3
      %p177 = por %p175, %p176
      %p178 = scmp.ne.s32.totalorder %s170, %s173
      %p179 = scmp.eq.s32.totalorder %s15, 0
      %p180 = por %p178, %p179
      %p181 = scmp.ne.s32.totalorder %s170, %s173
      %p182 = scmp.eq.s32.totalorder %s20, 3
      %p183 = por %p181, %p182
      %p184 = scmp.ne.s32.totalorder %s173, %s174
      %p185 = scmp.eq.s32.totalorder %s20, 0
      %p186 = por %p184, %p185
      %p187 = scmp.ne.s32.totalorder %s173, %s174
      %p188 = scmp.eq.s32.totalorder %s21, 3
      %p189 = por %p187, %p188
      %p191 = scmp.ne.s32.totalorder %s174, %s190
      %p192 = scmp.eq.s32.totalorder %s21, 0
      %p193 = por %p191, %p192
      %p194 = scmp.le.s32.totalorder 1, %s15
      %p195 = scmp.lt.s32.totalorder %s15, 5
      %p196 = pnand %p194, %p195
      %p197 = pneg %p196
      // Predicated region
      $region9: #{tpu_custom_call.1} parent=5 // pred_check
        _
      $region10: #{tpu_custom_call.1} parent=5 // pred_check_branch
        %199 = sbr.rel (%p196) target = $region12
      $region11: #{tpu_custom_call.1} parent=5 // pred_region
        %s200 = ssub.s32 %s15, 1
        // Predicated region
        $region13: #{tpu_custom_call.1} parent=11 // pred_check
          %p201 = pneg %p74
        $region14: #{tpu_custom_call.1} parent=11 // pred_check_branch
          %203 = sbr.rel (%p201) target = $region16
        $region15: #{tpu_custom_call.1} parent=11 // pred_region
          _
        $region16: #{tpu_custom_call.1} parent=11 // pred_fallthru
          _
        // Predicated region
        $region17: #{tpu_custom_call.1} parent=11 // pred_check
          %p204 = pneg %p95
        $region18: #{tpu_custom_call.1} parent=11 // pred_check_branch
          %206 = sbr.rel (%p204) target = $region20
        $region19: #{tpu_custom_call.1} parent=11 // pred_region
          _
        $region20: #{tpu_custom_call.1} parent=11 // pred_fallthru
          _
        // Predicated region
        $region21: #{tpu_custom_call.1} parent=11 // pred_check
          %p207 = pneg %p116
        $region22: #{tpu_custom_call.1} parent=11 // pred_check_branch
          %209 = sbr.rel (%p207) target = $region24
        $region23: #{tpu_custom_call.1} parent=11 // pred_region
          _
        $region24: #{tpu_custom_call.1} parent=11 // pred_fallthru
          _
        // Predicated region
        $region25: #{tpu_custom_call.1} parent=11 // pred_check
          %p210 = pneg %p137
        $region26: #{tpu_custom_call.1} parent=11 // pred_check_branch
          %212 = sbr.rel (%p210) target = $region28
        $region27: #{tpu_custom_call.1} parent=11 // pred_region
          _
        $region28: #{tpu_custom_call.1} parent=11 // pred_fallthru
          _
        // Predicated region
        $region29: #{tpu_custom_call.1} parent=11 // pred_check
          %p213 = pneg %p158
        $region30: #{tpu_custom_call.1} parent=11 // pred_check_branch
          %215 = sbr.rel (%p213) target = $region32
        $region31: #{tpu_custom_call.1} parent=11 // pred_region
          _
        $region32: #{tpu_custom_call.1} parent=11 // pred_fallthru
          _
      $region12: #{tpu_custom_call.1} parent=5 // pred_fallthru
        _
      %p216 = scmp.lt.s32.totalorder %s15, 4
      // Predicated region
      $region33: #{tpu_custom_call.1} parent=5 // pred_check
        %p217 = pneg %p216
      $region34: #{tpu_custom_call.1} parent=5 // pred_check_branch
        %219 = sbr.rel (%p217) target = $region36
      $region35: #{tpu_custom_call.1} parent=5 // pred_region
        // Predicated region
        $region37: #{tpu_custom_call.1} parent=35 // pred_check
          %p220 = pneg %p47
        $region38: #{tpu_custom_call.1} parent=35 // pred_check_branch
          %222 = sbr.rel (%p220) target = $region40
        $region39: #{tpu_custom_call.1} parent=35 // pred_region
          %p223 = scmp.lt.s32.totalorder %s22, 1
          %s224 = scalar_select %p223, %s22, 1
          %s225 = smul.addr %s224, 8
          %s226 = smul.addr %s225, 8
          %s227 = scalar_lea.vmem %s0, %s226
        $region40: #{tpu_custom_call.1} parent=35 // pred_fallthru
          _
      $region36: #{tpu_custom_call.1} parent=5 // pred_fallthru
        _
      %p228 = scmp.le.s32.totalorder 1, %s15
      %p229 = scmp.lt.s32.totalorder %s15, 5
      %p230 = pnand %p228, %p229
      %p231 = pneg %p230
      // Predicated region
      $region41: #{tpu_custom_call.1} parent=5 // pred_check
        _
      $region42: #{tpu_custom_call.1} parent=5 // pred_check_branch
        %233 = sbr.rel (%p230) target = $region44
      $region43: #{tpu_custom_call.1} parent=5 // pred_region
        %s234 = ssub.s32 %s15, 1
        %p235 = scmp.lt.s32.totalorder %s24, 1
        %s236 = scalar_select %p235, %s24, 1
        %s237 = smul.addr %s236, 8
        %s238 = smul.addr %s237, 8
        %s239 = scalar_lea.vmem %s0, %s238
        %p240 = pneg %p53
        %p241 = pneg %p50
        %p242 = pneg %p74
        %p243 = pneg %p71
        %p244 = pneg %p95
        %p245 = pneg %p92
        %p246 = pneg %p116
        %p247 = pneg %p113
        %p248 = pneg %p137
        %p249 = pneg %p134
        %p250 = pneg %p158
        %p251 = pneg %p155
        %p252 = pneg %p186
        %p253 = pneg %p183
        %s254 = sand.u32 %s173, 1
        %s255 = scalar_lea.sflag [#allocation6], %s254
        %s256 = sand.u32 %s173, 1
        %s257 = smul.addr %s256, 32
        %s258 = scalar_lea.vmem [#allocation5], %s257
        %p259 = scmp.lt.s32.totalorder %s24, 1
        %s260 = scalar_select %p259, %s24, 1
        %s261 = smul.addr %s260, 8
        %s262 = smul.addr %s261, 8
        %s263 = scalar_lea.vmem %s0, %s262
        %p265 = scmp.eq.s32.totalorder %s25, 0
        // Predicated region
        $region45: #{tpu_custom_call.1} parent=43 // pred_check
          %p266 = pneg %p265
        $region46: #{tpu_custom_call.1} parent=43 // pred_check_branch
          %268 = sbr.rel (%p266) target = $region48
        $region47: #{tpu_custom_call.1} parent=43 // pred_region
          %v269 = vld [vmem:[%s263] sm:$0xff]
          %v270 = vld [vmem:[%s263 + $0x8] sm:$0xff]
          %v271 = vld [vmem:[%s263 + $0x10] sm:$0xff]
          %v272 = vld [vmem:[%s263 + $0x18] sm:$0xff]
          %v273 = vld [vmem:[%s263 + $0x20] sm:$0xff]
          %v274 = vld [vmem:[%s263 + $0x28] sm:$0xff]
          %v275 = vld [vmem:[%s263 + $0x30] sm:$0xff]
          %v276 = vld [vmem:[%s263 + $0x38] sm:$0xff]
          %v277 = vpack.c.bf16 %v271, %v269
          %v278 = vpack.c.bf16 %v272, %v270
          %v279 = vpack.c.bf16 %v275, %v273
          %v280 = vpack.c.bf16 %v276, %v274
          %v281 = vld [vmem:[%s1] sm:$0xf]
          %v282 = vld [vmem:[%s1 + $0x4] sm:$0xf]
          %v283 = vld [vmem:[%s1 + $0x8] sm:$0xf]
          %v284 = vld [vmem:[%s2] sm:$0xff]
          %v285 = vld [vmem:[%s2 + $0x8] sm:$0xff]
          %v286 = vld [vmem:[%s2 + $0x10] sm:$0xff]
          %288 = vset.pattern.permute.xlu0 0
          %289 = vperm.xlu0 %288, %v284
          %v290 = vpop.permute.xlu0 %289
          %293 = vset.pattern.permute.xlu0 0
          %294 = vperm.xlu0 %293, %v285
          %v295 = vpop.permute.xlu0 %294
          %298 = vset.pattern.permute.xlu0 0
          %299 = vperm.xlu0 %298, %v286
          %v300 = vpop.permute.xlu0 %299
          %v305 = vunpack.c.l.b16 %v281
          %v306 = vunpack.c.l.b16 %v282
          %v307 = vunpack.c.l.b16 %v283
          %v308 = vpack.c.b16 %v306, %v305
          %v309 = vpack.c.b16 %v307, %v307
          %vm310 = vcmask 261120
          %v312 = vsel %vm310, %v308, 0
          %v315 = vsel %vm310, %v309, 0
          %317 = vmatprep.subr.bf16.mxu0 %v278
          %318 = vmatpush1.bf16.msra.mxu0 %v277
          %319 = vmatprep.subr.bf16.mxu0 %v280
          %320 = vmatpush1.bf16.msra.mxu0 %v279
          %321 = vmatprep.subr.bf16.mxu0 0
          %322 = vmatpush1.bf16.msra.mxu0 0
          %323 = vmatprep.subr.bf16.mxu0 0
          %324 = vmatpush1.bf16.msra.mxu0 0
          %325 = vmatprep.subr.bf16.mxu0 0
          %326 = vmatpush1.bf16.msra.mxu0 0
          %327 = vmatprep.subr.bf16.mxu0 0
          %328 = vmatpush1.bf16.msra.mxu0 0
          %329 = vmatprep.subr.bf16.mxu0 0
          %330 = vmatpush1.bf16.msra.mxu0 0
          %331 = vmatprep.subr.bf16.mxu0 0
          %332 = vmatpush1.bf16.msra.mxu0 0
          %333 = vmatprep.subr.bf16.mxu0 0
          %334 = vmatpush1.bf16.msra.mxu0 0
          %335 = vmatprep.subr.bf16.mxu0 0
          %336 = vmatpush1.bf16.msra.mxu0 0
          %337 = vmatprep.subr.bf16.mxu0 0
          %338 = vmatpush1.bf16.msra.mxu0 0
          %339 = vmatprep.subr.bf16.mxu0 0
          %340 = vmatpush1.bf16.msra.mxu0 0
          %341 = vmatprep.subr.bf16.mxu0 0
          %342 = vmatpush1.bf16.msra.mxu0 0
          %343 = vmatprep.subr.bf16.mxu0 0
          %344 = vmatpush1.bf16.msra.mxu0 0
          %345 = vmatprep.subr.bf16.mxu0 0
          %346 = vmatpush1.bf16.msra.mxu0 0
          %347 = vmatprep.subr.bf16.mxu0 0
          %348 = vmatpush1.bf16.msra.mxu0 0
          %349 = vmatprep.mubr.bf16.mxu0 0
          %350 = vmatmul.mubr.bf16.gmra.mrb[0].mxu0 %v312
          %v351 = vpop.f32.mrb[0].mxu0
          %v352 = vadd.f32 %v290, %v351
          %v353 = vpop.f32.mrb[0].mxu0
          %v354 = vadd.f32 %v290, %v353
          %v355 = vpop.f32.mrb[0].mxu0
          %v356 = vadd.f32 %v295, %v355
          %v357 = vpop.f32.mrb[0].mxu0
          %v358 = vadd.f32 %v295, %v357
          %359 = vmatprep.mubr.bf16.mxu0 0
          %360 = vmatmul.mubr.bf16.gmra.mrb[0].mxu0 %v315
          %v361 = vpop.f32.mrb[0].mxu0
          %v362 = vadd.f32 %v300, %v361
          %v363 = vpop.f32.mrb[0].mxu0
          %v364 = vadd.f32 %v300, %v363
          %v365 = vpop.f32.mrb[0].mxu0
          %v366 = vpop.f32.mrb[0].mxu0
          %367 = vdwg.mxu0
          %v368 = vpack.c.bf16 %v362, %v362
          %v369 = vpack.c.bf16 %v364, %v364
          %v372 = vcombine.low %v368, %v369
          %v374 = vunpack.c.l.s4 1983009808
          %v375 = vunpack.c.0.s8 %v374
          %v376 = vlaneseq
          %v377 = vshrl.u32 %v376, 7
          %v378 = vsub.s32 %v375, %v377
          %v379 = vrot.slane %v372, %v378
          %v380 = vcombine.high %v379, %v379
          %382 = vst [vmem:[#allocation2] sm:$0xf] %v380
          %383 = vrot.lane.b32.xlu0 %v352, 127
          %v384 = vpop.permute.xlu0 %383
          %385 = vrot.lane.b32.xlu0 %v356, 127
          %v386 = vpop.permute.xlu0 %385
          %387 = vrot.lane.b32.xlu0 %v362, 127
          %v388 = vpop.permute.xlu0 %387
          %389 = vrot.lane.b32.xlu0 %v354, 127
          %v390 = vpop.permute.xlu0 %389
          %391 = vrot.lane.b32.xlu0 %v358, 127
          %v392 = vpop.permute.xlu0 %391
          %393 = vrot.lane.b32.xlu0 %v364, 127
          %v394 = vpop.permute.xlu0 %393
          %v395 = vlaneseq
          %v396 = vand.u32 %v395, 127
          %vm397 = vcmp.lt.s32.totalorder %v396, 127
          %v398 = vsel %vm397, %v384, %v390
          %v399 = vsel %vm397, %v386, %v392
          %v400 = vsel %vm397, %v388, %v394
          %v401 = vsel %vm397, %v390, %v384
          %v402 = vsel %vm397, %v392, %v386
          %v403 = vsel %vm397, %v394, %v388
          %v404 = vmax.f32 %v352, %v398
          %v405 = vmax.f32 %v354, %v401
          %v406 = vmax.f32 %v356, %v399
          %v407 = vmax.f32 %v358, %v402
          %v408 = vmax.f32 %v362, %v400
          %v409 = vmax.f32 %v364, %v403
          %410 = vrot.lane.b32.xlu0 %v404, 112
          %v411 = vpop.permute.xlu0 %410
          %412 = vrot.lane.b32.xlu0 %v406, 112
          %v413 = vpop.permute.xlu0 %412
          %414 = vrot.lane.b32.xlu0 %v408, 112
          %v415 = vpop.permute.xlu0 %414
          %416 = vrot.lane.b32.xlu0 %v405, 112
          %v417 = vpop.permute.xlu0 %416
          %418 = vrot.lane.b32.xlu0 %v407, 112
          %v419 = vpop.permute.xlu0 %418
          %420 = vrot.lane.b32.xlu0 %v409, 112
          %v421 = vpop.permute.xlu0 %420
          %vm422 = vcmp.lt.s32.totalorder %v396, 112
          %v423 = vsel %vm422, %v411, %v417
          %v424 = vsel %vm422, %v413, %v419
          %v425 = vsel %vm422, %v415, %v421
          %v426 = vsel %vm422, %v417, %v411
          %v427 = vsel %vm422, %v419, %v413
          %v428 = vsel %vm422, %v421, %v415
          %v429 = vmax.f32 %v404, %v423
          %v430 = vmax.f32 %v405, %v426
          %v431 = vmax.f32 %v406, %v424
          %v432 = vmax.f32 %v407, %v427
          %v433 = vmax.f32 %v408, %v425
          %v434 = vmax.f32 %v409, %v428
          %v435 = vpack.c.bf16 %v431, %v429
          %v436 = vpack.c.bf16 %v432, %v430
          %v437 = vpack.c.bf16 %v433, %v433
          %v438 = vpack.c.bf16 %v434, %v434
          %v439 = vld [vmem:[%s5] sm:$0xf]
          %v440 = vld [vmem:[%s5 + $0x4] sm:$0xf]
          %v441 = vld [vmem:[%s5 + $0x8] sm:$0xf]
          %v442 = vld [vmem:[%s5 + $0xc] sm:$0xf]
          %v443 = vld [vmem:[%s5 + $0x10] sm:$0xf]
          %v444 = vld [vmem:[%s5 + $0x14] sm:$0xf]
          %v445 = vld [vmem:[%s5 + $0x18] sm:$0xf]
          %v446 = vld [vmem:[%s5 + $0x1c] sm:$0xf]
          %v447 = vld [vmem:[%s5 + $0x20] sm:$0xf]
          %v448 = vld [vmem:[%s5 + $0x24] sm:$0xf]
          %v449 = vld [vmem:[%s5 + $0x28] sm:$0xf]
          %v450 = vld [vmem:[%s5 + $0x2c] sm:$0xf]
          %v451 = vld [vmem:[%s5 + $0x30] sm:$0xf]
          %v452 = vld [vmem:[%s5 + $0x34] sm:$0xf]
          %v453 = vld [vmem:[%s5 + $0x38] sm:$0xf]
          %v454 = vld [vmem:[%s5 + $0x3c] sm:$0xf]
          %v455 = vld [vmem:[%s5 + $0x40] sm:$0xf]
          %v456 = vld [vmem:[%s5 + $0x44] sm:$0xf]
          %v457 = vld [vmem:[%s5 + $0x48] sm:$0xf]
          %v458 = vld [vmem:[%s5 + $0x4c] sm:$0xf]
          %v459 = vld [vmem:[%s5 + $0x50] sm:$0xf]
          %v460 = vld [vmem:[%s5 + $0x54] sm:$0xf]
          %v461 = vld [vmem:[%s5 + $0x58] sm:$0xf]
          %v462 = vld [vmem:[%s5 + $0x5c] sm:$0xf]
          %v463 = vld [vmem:[%s5 + $0x60] sm:$0xf]
          %v464 = vld [vmem:[%s5 + $0x64] sm:$0xf]
          %v465 = vld [vmem:[%s5 + $0x68] sm:$0xf]
          %v466 = vld [vmem:[%s5 + $0x6c] sm:$0xf]
          %v467 = vld [vmem:[%s5 + $0x70] sm:$0xf]
          %v468 = vld [vmem:[%s5 + $0x74] sm:$0xf]
          %v469 = vld [vmem:[%s5 + $0x78] sm:$0xf]
          %v470 = vld [vmem:[%s5 + $0x7c] sm:$0xf]
          %v503 = vunpack.c.l.b16 %v439
          %v504 = vunpack.c.l.b16 %v440
          %v505 = vunpack.c.l.b16 %v441
          %v506 = vunpack.c.l.b16 %v442
          %v507 = vunpack.c.l.b16 %v443
          %v508 = vunpack.c.l.b16 %v444
          %v509 = vunpack.c.l.b16 %v445
          %v510 = vunpack.c.l.b16 %v446
          %v511 = vunpack.c.l.b16 %v447
          %v512 = vunpack.c.l.b16 %v448
          %v513 = vunpack.c.l.b16 %v449
          %v514 = vunpack.c.l.b16 %v450
          %v515 = vunpack.c.l.b16 %v451
          %v516 = vunpack.c.l.b16 %v452
          %v517 = vunpack.c.l.b16 %v453
          %v518 = vunpack.c.l.b16 %v454
          %v519 = vunpack.c.l.b16 %v455
          %v520 = vunpack.c.l.b16 %v456
          %v521 = vunpack.c.l.b16 %v457
          %v522 = vunpack.c.l.b16 %v458
          %v523 = vunpack.c.l.b16 %v459
          %v524 = vunpack.c.l.b16 %v460
          %v525 = vunpack.c.l.b16 %v461
          %v526 = vunpack.c.l.b16 %v462
          %v527 = vunpack.c.l.b16 %v463
          %v528 = vunpack.c.l.b16 %v464
          %v529 = vunpack.c.l.b16 %v465
          %v530 = vunpack.c.l.b16 %v466
          %v531 = vunpack.c.l.b16 %v467
          %v532 = vunpack.c.l.b16 %v468
          %v533 = vunpack.c.l.b16 %v469
          %v534 = vunpack.c.l.b16 %v470
          %v535 = vpack.c.b16 %v504, %v503
          %v536 = vpack.c.b16 %v506, %v505
          %v537 = vpack.c.b16 %v508, %v507
          %v538 = vpack.c.b16 %v510, %v509
          %v539 = vpack.c.b16 %v512, %v511
          %v540 = vpack.c.b16 %v514, %v513
          %v541 = vpack.c.b16 %v516, %v515
          %v542 = vpack.c.b16 %v518, %v517
          %v543 = vpack.c.b16 %v520, %v519
          %v544 = vpack.c.b16 %v522, %v521
          %v545 = vpack.c.b16 %v524, %v523
          %v546 = vpack.c.b16 %v526, %v525
          %v547 = vpack.c.b16 %v528, %v527
          %v548 = vpack.c.b16 %v530, %v529
          %v549 = vpack.c.b16 %v532, %v531
          %v550 = vpack.c.b16 %v534, %v533
          %567 = vmatprep.subr.bf16.mxu0 0
          %568 = vmatpush1.bf16.msra.mxu0 %v535
          %569 = vmatprep.subr.bf16.mxu0 0
          %570 = vmatpush1.bf16.msra.mxu0 %v536
          %571 = vmatprep.subr.bf16.mxu0 0
          %572 = vmatpush1.bf16.msra.mxu0 %v537
          %573 = vmatprep.subr.bf16.mxu0 0
          %574 = vmatpush1.bf16.msra.mxu0 %v538
          %575 = vmatprep.subr.bf16.mxu0 0
          %576 = vmatpush1.bf16.msra.mxu0 %v539
          %577 = vmatprep.subr.bf16.mxu0 0
          %578 = vmatpush1.bf16.msra.mxu0 %v540
          %579 = vmatprep.subr.bf16.mxu0 0
          %580 = vmatpush1.bf16.msra.mxu0 %v541
          %581 = vmatprep.subr.bf16.mxu0 0
          %582 = vmatpush1.bf16.msra.mxu0 %v542
          %583 = vmatprep.subr.bf16.mxu0 0
          %584 = vmatpush1.bf16.msra.mxu0 %v543
          %585 = vmatprep.subr.bf16.mxu0 0
          %586 = vmatpush1.bf16.msra.mxu0 %v544
          %587 = vmatprep.subr.bf16.mxu0 0
          %588 = vmatpush1.bf16.msra.mxu0 %v545
          %589 = vmatprep.subr.bf16.mxu0 0
          %590 = vmatpush1.bf16.msra.mxu0 %v546
          %591 = vmatprep.subr.bf16.mxu0 0
          %592 = vmatpush1.bf16.msra.mxu0 %v547
          %593 = vmatprep.subr.bf16.mxu0 0
          %594 = vmatpush1.bf16.msra.mxu0 %v548
          %595 = vmatprep.subr.bf16.mxu0 0
          %596 = vmatpush1.bf16.msra.mxu0 %v549
          %597 = vmatprep.subr.bf16.mxu0 0
          %598 = vmatpush1.bf16.msra.mxu0 %v550
          %599 = vmatprep.mubr.bf16.mxu0 %v436
          %600 = vmatmul.mubr.bf16.gmra.mrb[0].mxu0 %v435
          %v601 = vpop.f32.mrb[0].mxu0
          %v602 = vadd.f32 0.0, %v601
          %v603 = vpop.f32.mrb[0].mxu0
          %v604 = vpop.f32.mrb[0].mxu0
          %v605 = vadd.f32 0.0, %v604
          %v606 = vpop.f32.mrb[0].mxu0
          %607 = vmatprep.mubr.bf16.mxu0 %v438
          %608 = vmatmul.mubr.bf16.gmra.mrb[0].mxu0 %v437
          %v609 = vpop.f32.mrb[0].mxu0
          %v610 = vadd.f32 0.0, %v609
          %v611 = vpop.f32.mrb[0].mxu0
          %v612 = vpop.f32.mrb[0].mxu0
          %v613 = vpop.f32.mrb[0].mxu0
          %614 = vdwg.mxu0
          %615 = vxpose.xlu0.b32.start [1/16] %v602, 128
          %616 = vxpose.xlu0.b32.cont [2/16] 0.0, 128
          %617 = vxpose.xlu0.b32.cont [3/16] 0.0, 128
          %618 = vxpose.xlu0.b32.cont [4/16] 0.0, 128
          %619 = vxpose.xlu0.b32.cont [5/16] 0.0, 128
          %620 = vxpose.xlu0.b32.cont [6/16] 0.0, 128
          %621 = vxpose.xlu0.b32.cont [7/16] 0.0, 128
          %622 = vxpose.xlu0.b32.cont [8/16] 0.0, 128
          %623 = vxpose.xlu0.b32.cont [9/16] 0.0, 128
          %624 = vxpose.xlu0.b32.cont [10/16] 0.0, 128
          %625 = vxpose.xlu0.b32.cont [11/16] 0.0, 128
          %626 = vxpose.xlu0.b32.cont [12/16] 0.0, 128
          %627 = vxpose.xlu0.b32.cont [13/16] 0.0, 128
          %628 = vxpose.xlu0.b32.cont [14/16] 0.0, 128
          %629 = vxpose.xlu0.b32.cont [15/16] 0.0, 128
          %630 = vxpose.xlu0.b32.end [16/16] 0.0, 128
          %v631 = vpop.trf.xlu0
          %v632 = vpop.trf.xlu0
          %v633 = vpop.trf.xlu0
          %v634 = vpop.trf.xlu0
          %v635 = vpop.trf.xlu0
          %v636 = vpop.trf.xlu0
          %v637 = vpop.trf.xlu0
          %v638 = vpop.trf.xlu0
          %v639 = vpop.trf.xlu0
          %v640 = vpop.trf.xlu0
          %v641 = vpop.trf.xlu0
          %v642 = vpop.trf.xlu0
          %v643 = vpop.trf.xlu0
          %v644 = vpop.trf.xlu0
          %v645 = vpop.trf.xlu0
          %v646 = vpop.trf.xlu0
          %v647 = vpack.c.bf16 %v632, %v631
          %v648 = vpack.c.bf16 %v634, %v633
          %v649 = vpack.c.bf16 %v636, %v635
          %v650 = vpack.c.bf16 %v638, %v637
          %vm651 = vcmask 31744
          %652 = vst.msk [vmem:[#allocation3] sm:$0xff] %vm651, %v647
          %653 = vst.msk [vmem:[#allocation3 + $0x8] sm:$0xff] %vm651, %v648
          %654 = vst.msk [vmem:[#allocation3 + $0x10] sm:$0xff] %vm651, %v649
          %655 = vst.msk [vmem:[#allocation3 + $0x18] sm:$0xff] %vm651, %v650
          %v656 = vpack.c.bf16 %v605, %v602
          %v657 = vpack.c.bf16 %v610, %v610
          %vm660 = vcmask 1045504
          %v661 = vrot.slane %v656, 2
          %v662 = vrot.slane %v657, 2
          %v663 = vsel %vm660, %v661, %v662
          %vm665 = vcmask 523264
          %666 = vst.msk [vmem:[#allocation4] sm:$0xff] %vm665, %v663
        $region48: #{tpu_custom_call.1} parent=43 // pred_fallthru
          _
        %s667 = smul.u32 %s25, 128
        %s668 = sshra.s32 %s667, 7
        %s669 = sand.u32 %s667, 127
        %s670 = smul.addr %s668, 2
        %s671 = scalar_lea.vmem [#allocation2], %s670
        %v672 = vld [vmem:[%s671] sm:$0x3]
        %v673 = vld [vmem:[#allocation3] sm:$0xff]
        %v674 = vld [vmem:[#allocation3 + $0x8] sm:$0xff]
        %v675 = vld [vmem:[#allocation3 + $0x10] sm:$0xff]
        %v676 = vld [vmem:[#allocation3 + $0x18] sm:$0xff]
        %vm677 = vcmask 31744
        %v679 = vsel %vm677, %v673, 0
        %v682 = vsel %vm677, %v674, 0
        %v685 = vsel %vm677, %v675, 0
        %v688 = vsel %vm677, %v676, 0
        %vm690 = vcmask 1041408
        %v692 = vsel %vm690, %v672, 0
        %694 = vmatprep.subr.bf16.mxu0 0
        %695 = vmatpush1.bf16.msra.mxu0 %v692
        %696 = vmatprep.subr.bf16.mxu0 0
        %697 = vmatpush1.bf16.msra.mxu0 0
        %698 = vmatprep.subr.bf16.mxu0 0
        %699 = vmatpush1.bf16.msra.mxu0 0
        %700 = vmatprep.subr.bf16.mxu0 0
        %701 = vmatpush1.bf16.msra.mxu0 0
        %702 = vmatprep.subr.bf16.mxu0 0
        %703 = vmatpush1.bf16.msra.mxu0 0
        %704 = vmatprep.subr.bf16.mxu0 0
        %705 = vmatpush1.bf16.msra.mxu0 0
        %706 = vmatprep.subr.bf16.mxu0 0
        %707 = vmatpush1.bf16.msra.mxu0 0
        %708 = vmatprep.subr.bf16.mxu0 0
        %709 = vmatpush1.bf16.msra.mxu0 0
        %710 = vmatprep.subr.bf16.mxu0 0
        %711 = vmatpush1.bf16.msra.mxu0 0
        %712 = vmatprep.subr.bf16.mxu0 0
        %713 = vmatpush1.bf16.msra.mxu0 0
        %714 = vmatprep.subr.bf16.mxu0 0
        %715 = vmatpush1.bf16.msra.mxu0 0
        %716 = vmatprep.subr.bf16.mxu0 0
        %717 = vmatpush1.bf16.msra.mxu0 0
        %718 = vmatprep.subr.bf16.mxu0 0
        %719 = vmatpush1.bf16.msra.mxu0 0
        %720 = vmatprep.subr.bf16.mxu0 0
        %721 = vmatpush1.bf16.msra.mxu0 0
        %722 = vmatprep.subr.bf16.mxu0 0
        %723 = vmatpush1.bf16.msra.mxu0 0
        %724 = vmatprep.subr.bf16.mxu0 0
        %725 = vmatpush1.bf16.msra.mxu0 0
        %726 = vmatprep.mubr.bf16.mxu0 0
        %727 = vmatmul.mubr.bf16.gmra.mrb[0].mxu0 %v679
        %v728 = vpop.f32.mrb[0].mxu0
        %v729 = vadd.f32 0.0, %v728
        %v730 = vpop.f32.mrb[0].mxu0
        %v731 = vpop.f32.mrb[0].mxu0
        %v732 = vadd.f32 0.0, %v731
        %v733 = vpop.f32.mrb[0].mxu0
        %734 = vmatprep.mubr.bf16.mxu0 0
        %735 = vmatmul.mubr.bf16.gmra.mrb[0].mxu0 %v682
        %v736 = vpop.f32.mrb[0].mxu0
        %v737 = vadd.f32 0.0, %v736
        %v738 = vpop.f32.mrb[0].mxu0
        %v739 = vpop.f32.mrb[0].mxu0
        %v740 = vadd.f32 0.0, %v739
        %v741 = vpop.f32.mrb[0].mxu0
        %742 = vmatprep.mubr.bf16.mxu0 0
        %743 = vmatmul.mubr.bf16.gmra.mrb[0].mxu0 %v685
        %v744 = vpop.f32.mrb[0].mxu0
        %v745 = vadd.f32 0.0, %v744
        %v746 = vpop.f32.mrb[0].mxu0
        %v747 = vpop.f32.mrb[0].mxu0
        %v748 = vadd.f32 0.0, %v747
        %v749 = vpop.f32.mrb[0].mxu0
        %750 = vmatprep.mubr.bf16.mxu0 0
        %751 = vmatmul.mubr.bf16.gmra.mrb[0].mxu0 %v688
        %v752 = vpop.f32.mrb[0].mxu0
        %v753 = vadd.f32 0.0, %v752
        %v754 = vpop.f32.mrb[0].mxu0
        %v755 = vpop.f32.mrb[0].mxu0
        %v756 = vadd.f32 0.0, %v755
        %v757 = vpop.f32.mrb[0].mxu0
        %758 = vdwg.mxu0
        %v759 = vmax.f32 %v729, %v745
        %v760 = vmax.f32 %v732, %v748
        %v761 = vmax.f32 %v737, %v753
        %v762 = vmax.f32 %v740, %v756
        %v763 = vmax.f32 %v759, %v760
        %v764 = vmax.f32 %v761, %v762
        %v765 = vmax.f32 %v763, %v764
        %v766 = vrot.slane %v765, 4
        %v767 = vmax.f32 %v765, %v766
        %v768 = vrot.slane %v767, 2
        %v769 = vmax.f32 %v767, %v768
        %v770 = vrot.slane %v769, 1
        %v771 = vmax.f32 %v769, %v770
        %v772 = vsub.f32 %v729, %v771
        %v773 = vsub.f32 %v732, %v771
        %v774 = vsub.f32 %v737, %v771
        %v775 = vsub.f32 %v740, %v771
        %v776 = vsub.f32 %v745, %v771
        %v777 = vsub.f32 %v748, %v771
        %v778 = vsub.f32 %v753, %v771
        %v779 = vsub.f32 %v756, %v771
        %v780 = vmul.f32 %v772, 1.442695
        %v781 = vpow.pop %v780
        %v782 = vmul.f32 %v773, 1.442695
        %v783 = vpow.pop %v782
        %v784 = vmul.f32 %v774, 1.442695
        %v785 = vpow.pop %v784
        %v786 = vmul.f32 %v775, 1.442695
        %v787 = vpow.pop %v786
        %v788 = vmul.f32 %v776, 1.442695
        %v789 = vpow.pop %v788
        %v790 = vmul.f32 %v777, 1.442695
        %v791 = vpow.pop %v790
        %v792 = vmul.f32 %v778, 1.442695
        %v793 = vpow.pop %v792
        %v794 = vmul.f32 %v779, 1.442695
        %v795 = vpow.pop %v794
        %v796 = vadd.f32 %v781, %v783
        %v797 = vadd.f32 %v796, %v785
        %v798 = vadd.f32 %v797, %v787
        %v799 = vadd.f32 %v798, %v789
        %v800 = vadd.f32 %v799, %v791
        %v801 = vadd.f32 %v800, %v793
        %v802 = vadd.f32 %v801, %v795
        %v803 = vrot.slane %v802, 4
        %v804 = vadd.f32 %v802, %v803
        %v805 = vrot.slane %v804, 2
        %v806 = vadd.f32 %v804, %v805
        %v807 = vrot.slane %v806, 1
        %v808 = vadd.f32 %v806, %v807
        %v809 = vrcp.pop %v808
        %v810 = vmul.f32 %v781, %v809
        %v811 = vmul.f32 %v783, %v809
        %v812 = vmul.f32 %v785, %v809
        %v813 = vmul.f32 %v787, %v809
        %v814 = vmul.f32 %v789, %v809
        %v815 = vmul.f32 %v791, %v809
        %v816 = vmul.f32 %v793, %v809
        %v817 = vmul.f32 %v795, %v809
        %v818 = vld [vmem:[#allocation4] sm:$0xff]
        %v819 = vpack.c.bf16 %v811, %v810
        %v820 = vpack.c.bf16 %v813, %v812
        %v821 = vpack.c.bf16 %v815, %v814
        %v822 = vpack.c.bf16 %v817, %v816
        %vm823 = vcmask 523264
        %v825 = vsel %vm823, %v818, 0
        %827 = vmatprep.subr.bf16.mxu0 0
        %828 = vmatpush1.bf16.msra.mxu0 %v819
        %829 = vmatprep.subr.bf16.mxu0 0
        %830 = vmatpush1.bf16.msra.mxu0 %v820
        %831 = vmatprep.subr.bf16.mxu0 0
        %832 = vmatpush1.bf16.msra.mxu0 %v821
        %833 = vmatprep.subr.bf16.mxu0 0
        %834 = vmatpush1.bf16.msra.mxu0 %v822
        %835 = vmatprep.subr.bf16.mxu0 0
        %836 = vmatpush1.bf16.msra.mxu0 0
        %837 = vmatprep.subr.bf16.mxu0 0
        %838 = vmatpush1.bf16.msra.mxu0 0
        %839 = vmatprep.subr.bf16.mxu0 0
        %840 = vmatpush1.bf16.msra.mxu0 0
        %841 = vmatprep.subr.bf16.mxu0 0
        %842 = vmatpush1.bf16.msra.mxu0 0
        %843 = vmatprep.subr.bf16.mxu0 0
        %844 = vmatpush1.bf16.msra.mxu0 0
        %845 = vmatprep.subr.bf16.mxu0 0
        %846 = vmatpush1.bf16.msra.mxu0 0
        %847 = vmatprep.subr.bf16.mxu0 0
        %848 = vmatpush1.bf16.msra.mxu0 0
        %849 = vmatprep.subr.bf16.mxu0 0
        %850 = vmatpush1.bf16.msra.mxu0 0
        %851 = vmatprep.subr.bf16.mxu0 0
        %852 = vmatpush1.bf16.msra.mxu0 0
        %853 = vmatprep.subr.bf16.mxu0 0
        %854 = vmatpush1.bf16.msra.mxu0 0
        %855 = vmatprep.subr.bf16.mxu0 0
        %856 = vmatpush1.bf16.msra.mxu0 0
        %857 = vmatprep.subr.bf16.mxu0 0
        %858 = vmatpush1.bf16.msra.mxu0 0
        %859 = vmatprep.mubr.bf16.mxu0 0
        %860 = vmatmul.mubr.bf16.gmra.mrb[0].mxu0 %v825
        %v861 = vpop.f32.mrb[0].mxu0
        %v862 = vadd.f32 0.0, %v861
        %v863 = vpop.f32.mrb[0].mxu0
        %v864 = vpop.f32.mrb[0].mxu0
        %v865 = vadd.f32 0.0, %v864
        %v866 = vpop.f32.mrb[0].mxu0
        %867 = vdwg.mxu0
        %v868 = vld [vmem:[%s3] sm:$0xf]
        %v869 = vld [vmem:[%s3 + $0x4] sm:$0xf]
        %v870 = vld [vmem:[%s3 + $0x8] sm:$0xf]
        %v871 = vld [vmem:[%s3 + $0xc] sm:$0xf]
        %v872 = vpack.c.bf16 %v865, %v862
        %v873 = vld [vmem:[%s4] sm:$0xff]
        %v874 = vld [vmem:[%s4 + $0x8] sm:$0xff]
        %v875 = vld [vmem:[%s4 + $0x10] sm:$0xff]
        %v876 = vld [vmem:[%s4 + $0x18] sm:$0xff]
        %878 = vset.pattern.permute.xlu0 0
        %879 = vperm.xlu0 %878, %v873
        %v880 = vpop.permute.xlu0 %879
        %883 = vset.pattern.permute.xlu0 0
        %884 = vperm.xlu0 %883, %v874
        %v885 = vpop.permute.xlu0 %884
        %888 = vset.pattern.permute.xlu0 0
        %889 = vperm.xlu0 %888, %v875
        %v890 = vpop.permute.xlu0 %889
        %893 = vset.pattern.permute.xlu0 0
        %894 = vperm.xlu0 %893, %v876
        %v895 = vpop.permute.xlu0 %894
        %v901 = vunpack.c.l.b16 %v868
        %v902 = vunpack.c.l.b16 %v869
        %v903 = vunpack.c.l.b16 %v870
        %v904 = vunpack.c.l.b16 %v871
        %v905 = vpack.c.b16 %v902, %v901
        %v906 = vpack.c.b16 %v904, %v903
        %vm907 = vcmask 130048
        %v909 = vsel %vm907, %v905, 0
        %v912 = vsel %vm907, %v906, 0
        %914 = vmatprep.subr.bf16.mxu0 0
        %915 = vmatpush1.bf16.msra.mxu0 %v872
        %916 = vmatprep.subr.bf16.mxu0 0
        %917 = vmatpush1.bf16.msra.mxu0 0
        %918 = vmatprep.subr.bf16.mxu0 0
        %919 = vmatpush1.bf16.msra.mxu0 0
        %920 = vmatprep.subr.bf16.mxu0 0
        %921 = vmatpush1.bf16.msra.mxu0 0
        %922 = vmatprep.subr.bf16.mxu0 0
        %923 = vmatpush1.bf16.msra.mxu0 0
        %924 = vmatprep.subr.bf16.mxu0 0
        %925 = vmatpush1.bf16.msra.mxu0 0
        %926 = vmatprep.subr.bf16.mxu0 0
        %927 = vmatpush1.bf16.msra.mxu0 0
        %928 = vmatprep.subr.bf16.mxu0 0
        %929 = vmatpush1.bf16.msra.mxu0 0
        %930 = vmatprep.subr.bf16.mxu0 0
        %931 = vmatpush1.bf16.msra.mxu0 0
        %932 = vmatprep.subr.bf16.mxu0 0
        %933 = vmatpush1.bf16.msra.mxu0 0
        %934 = vmatprep.subr.bf16.mxu0 0
        %935 = vmatpush1.bf16.msra.mxu0 0
        %936 = vmatprep.subr.bf16.mxu0 0
        %937 = vmatpush1.bf16.msra.mxu0 0
        %938 = vmatprep.subr.bf16.mxu0 0
        %939 = vmatpush1.bf16.msra.mxu0 0
        %940 = vmatprep.subr.bf16.mxu0 0
        %941 = vmatpush1.bf16.msra.mxu0 0
        %942 = vmatprep.subr.bf16.mxu0 0
        %943 = vmatpush1.bf16.msra.mxu0 0
        %944 = vmatprep.subr.bf16.mxu0 0
        %945 = vmatpush1.bf16.msra.mxu0 0
        %946 = vmatprep.mubr.bf16.mxu0 0
        %947 = vmatmul.mubr.bf16.gmra.mrb[0].mxu0 %v909
        %v948 = vpop.f32.mrb[0].mxu0
        %v949 = vadd.f32 %v880, %v948
        %v950 = vpop.f32.mrb[0].mxu0
        %v951 = vpop.f32.mrb[0].mxu0
        %v952 = vadd.f32 %v885, %v951
        %v953 = vpop.f32.mrb[0].mxu0
        %954 = vmatprep.mubr.bf16.mxu0 0
        %955 = vmatmul.mubr.bf16.gmra.mrb[0].mxu0 %v912
        %v956 = vpop.f32.mrb[0].mxu0
        %v957 = vadd.f32 %v890, %v956
        %v958 = vpop.f32.mrb[0].mxu0
        %v959 = vpop.f32.mrb[0].mxu0
        %v960 = vadd.f32 %v895, %v959
        %v961 = vpop.f32.mrb[0].mxu0
        %962 = vdwg.mxu0
        %s963 = smul.addr %s668, 8
        %s964 = scalar_lea.vmem %s263, %s963
        %v965 = vld [vmem:[%s964] sm:$0xff]
        %v966 = vld [vmem:[%s964 + $0x10] sm:$0xff]
        %v967 = vld [vmem:[%s964 + $0x20] sm:$0xff]
        %v968 = vld [vmem:[%s964 + $0x30] sm:$0xff]
        %v969 = vadd.f32 %v949, %v965
        %v970 = vadd.f32 %v952, %v966
        %v971 = vadd.f32 %v957, %v967
        %v972 = vadd.f32 %v960, %v968
        %973 = vst [vmem:[%s258] sm:$0xff] %v969
        %974 = vst [vmem:[%s258 + $0x8] sm:$0xff] %v970
        %975 = vst [vmem:[%s258 + $0x10] sm:$0xff] %v971
        %976 = vst [vmem:[%s258 + $0x18] sm:$0xff] %v972
        %s977 = sand.u32 %s173, 1
        %s978 = scalar_lea.sflag [#allocation6], %s977
        %s979 = sand.u32 %s173, 1
        %s980 = smul.addr %s979, 32
        %s981 = scalar_lea.vmem [#allocation5], %s980
        // Predicated region
        $region49: #{tpu_custom_call.1} parent=43 // pred_check
          %p982 = pneg %p183
        $region50: #{tpu_custom_call.1} parent=43 // pred_check_branch
          %984 = sbr.rel (%p982) target = $region52
        $region51: #{tpu_custom_call.1} parent=43 // pred_region
          %s986 = ssub.s32 512, 512
          %987 = vsyncadd %s978, %s986
          %s988 = smul.addr %s24, 8
          %s989 = sadd.s32 %s25, %s988
          %s990 = smul.addr %s989, 128
          %s991 = scalar_lea.hbm %s6, %s990
          %s992 = sshll.u32 %s981, 4
          %s993 = int_to_ptr.vmem [resolvable:$true] %s992
          %998 = dma.vmem_to_hbm [thread:$0]  %s993, 512, %s991, %s978, 128, 256, 8
        $region52: #{tpu_custom_call.1} parent=43 // pred_fallthru
          _
      $region44: #{tpu_custom_call.1} parent=5 // pred_fallthru
        _
      %p999 = scmp.le.s32.totalorder 2, %s15
      // Predicated region
      $region53: #{tpu_custom_call.1} parent=5 // pred_check
        %p1000 = pneg %p999
      $region54: #{tpu_custom_call.1} parent=5 // pred_check_branch
        %1002 = sbr.rel (%p1000) target = $region56
      $region55: #{tpu_custom_call.1} parent=5 // pred_region
        %s1003 = ssub.s32 %s15, 2
        // Predicated region
        $region57: #{tpu_custom_call.1} parent=55 // pred_check
          %p1004 = pneg %p189
        $region58: #{tpu_custom_call.1} parent=55 // pred_check_branch
          %1006 = sbr.rel (%p1004) target = $region60
        $region59: #{tpu_custom_call.1} parent=55 // pred_region
          %s1007 = sand.u32 %s174, 1
          %s1008 = scalar_lea.sflag [#allocation6], %s1007
          %s1009 = sand.u32 %s174, 1
          %s1010 = smul.addr %s1009, 32
          %s1011 = scalar_lea.vmem [#allocation5], %s1010
          %1012 = dma.done %s1008, 512
        $region60: #{tpu_custom_call.1} parent=55 // pred_fallthru
          _
      $region56: #{tpu_custom_call.1} parent=5 // pred_fallthru
        _
    $region6: #{tpu_custom_call.1} parent=1 // loop_footer
      %s19 = sadd.s32 1, %s15
    $region7: #{tpu_custom_call.1} parent=1 // loop_footer_branch
      %14 = sbr.rel target = $region3
    $region8: #{tpu_custom_call.1} parent=1 // loop_exit
      _
    %1013 = vsyncpa [#allocation6], 1
    %s1014 = scalar_lea.sflag [#allocation6], 1
    %1015 = vsyncpa %s1014, 1

</llo_original>
